<compile_context>
chip_gen: v6e
topology: v6e:2x2x1
jax: 0.10.0
libtpu: 0.0.40
codegen_flags: <defaults>
</compile_context>

<pallas_src>
import functools

import jax
import jax.numpy as jnp
from jax import lax
from jax.experimental import pallas as pl
from jax.experimental.pallas import tpu as pltpu


def _kth_largest_nonneg_i32(keys, mask_f, k, nbits):
    """Exact k-th largest (1-indexed) non-negative int32 key among mask.

    keys   : (1, Np) int32, all values >= 0 (only bits nbits-1..0 used)
    mask_f : (1, Np) float32 in {0, 1} — which lanes participate
    k      : float32 scalar (integer valued); result is exact when
             1 <= k <= sum(mask_f)
    Returns the k-th largest key as an int32 scalar (radix select, MSB->LSB).
    """
    def body(_, carry):
        prefix, fixed, remaining, bit = carry
        in_grp = jnp.bitwise_and(keys, fixed) == prefix      # high bits match
        has_b = jnp.bitwise_and(keys, bit) != 0              # current bit set
        cnt = jnp.sum(jnp.where(in_grp & has_b, mask_f, 0.0))
        take = cnt >= remaining                               # enough in "1" group
        prefix = jnp.where(take, jnp.bitwise_or(prefix, bit), prefix)
        remaining = jnp.where(take, remaining, remaining - cnt)
        fixed = jnp.bitwise_or(fixed, bit)
        bit = jnp.right_shift(bit, 1)
        return prefix, fixed, remaining, bit

    init = (jnp.int32(0), jnp.int32(0), k.astype(jnp.float32),
            jnp.int32(1 << (nbits - 1)))
    prefix, _, _, _ = lax.fori_loop(0, nbits, body, init)
    return prefix


def _multibox_kernel(neg_pos_ratio_mid, neg_pos_ratio_low, n_valid, idx_bits,
                     conf_ref, loc_ref, gt_ref, lab_ref, out_ref):
    C, Np = conf_ref.shape[1], conf_ref.shape[2]
    f32 = jnp.float32

    conf = conf_ref[0]            # (C, Np) f32, priors on lanes
    loc = loc_ref[0]              # (4, Np) f32 predicted locations
    gt = gt_ref[0]                # (4, Np) f32 gt locations
    labs = lab_ref[0]             # (3, Np) int32: labels, labels_mid, labels_low

    idx_row = lax.broadcasted_iota(jnp.int32, (1, Np), 1)    # prior index on lanes
    valid = idx_row < n_valid                                # mask lane padding

    lab = labs[0:1, :]
    labm = labs[1:2, :]
    labl = labs[2:3, :]

    # ---- log-softmax over classes (sublane axis, C is small) ----
    m = jnp.max(conf, axis=0, keepdims=True)                                 # (1,Np)
    lse = m + jnp.log(jnp.sum(jnp.exp(conf - m), axis=0, keepdims=True))     # (1,Np)
    bg_loss = lse - conf[0:1, :]           # -log_softmax(conf)[..., 0]      # (1,Np)

    # ---- hard negative mining ----
    # TODO(synk): box_utils.hard_negative_mining7 source not provided; this is
    # rank-based HNM with num_neg = r_mid*|labels_mid>0| + r_low*|labels_low>0|
    # (pred_label is not used because its role in mining7 is unknown).
    pos_mask = (lab > 0) & valid
    cand = jnp.logical_not(pos_mask) & valid                                 # (1,Np)
    cand_f = cand.astype(f32)
    n_cand = jnp.sum(cand_f)

    npos_mid = jnp.sum(jnp.where((labm > 0) & valid, 1.0, 0.0))
    npos_low = jnp.sum(jnp.where((labl > 0) & valid, 1.0, 0.0))
    num_neg = jnp.floor(neg_pos_ratio_mid * npos_mid +
                        neg_pos_ratio_low * npos_low)
    num_neg = jnp.clip(num_neg, 0.0, n_cand)

    # Exact top-num_neg selection: the bit pattern of a non-negative f32 is a
    # monotone non-negative int32 key -> radix-select the num_neg-th largest
    # candidate loss (31 counting passes), then break ties by smallest index
    # (idx_bits more passes).
    keys = pltpu.bitcast(jnp.maximum(bg_loss, 0.0), jnp.int32)               # (1,Np)
    k_eff = jnp.maximum(num_neg, 1.0)
    thr = _kth_largest_nonneg_i32(keys, cand_f, k_eff, 31)

    gt_mask = cand & (keys > thr)
    eq_mask = cand & (keys == thr)
    cnt_gt = jnp.sum(gt_mask.astype(f32))
    rem_ties = num_neg - cnt_gt            # in [1, #ties] whenever num_neg >= 1

    rev_idx = (Np - 1) - idx_row           # k-th smallest index == k-th largest rev
    rev_thr = _kth_largest_nonneg_i32(rev_idx, eq_mask.astype(f32),
                                      jnp.maximum(rem_ties, 1.0), idx_bits)
    tie_sel = eq_mask & (rev_idx >= rev_thr) & (rem_ties >= 0.5)

    neg_mask = gt_mask | tie_sel
    sel_mask = pos_mask | neg_mask                                           # (1,Np)

    # ---- classification: summed cross-entropy over selected priors ----
    cls_iota = lax.broadcasted_iota(jnp.int32, (C, Np), 0)
    onehot = (cls_iota == lab).astype(f32)                                   # (C,Np)
    picked = jnp.sum(conf * onehot, axis=0, keepdims=True)                   # (1,Np)
    ce = lse - picked
    cls_tot = jnp.sum(jnp.where(sel_mask, ce, 0.0))

    # ---- smooth L1 (beta=1, summed) over positive priors ----
    diff = loc - gt                                                          # (4,Np)
    ad = jnp.abs(diff)
    sl1 = jnp.where(ad < 1.0, 0.5 * diff * diff, ad - 0.5)
    sl1_per = jnp.sum(sl1, axis=0, keepdims=True)                            # (1,Np)
    sl1_tot = jnp.sum(jnp.where(pos_mask, sl1_per, 0.0))

    npos_tot = jnp.sum(jnp.where(pos_mask, 1.0, 0.0))
    nsel_tot = jnp.sum(jnp.where(sel_mask, 1.0, 0.0))

    # single lane-dense output tile: lane 0=cls, 1=smooth-l1, 2=#pos, 3=#sel
    lane = lax.broadcasted_iota(jnp.int32, (1, 128), 1)
    vec = (jnp.where(lane == 0, cls_tot, 0.0)
           + jnp.where(lane == 1, sl1_tot, 0.0)
           + jnp.where(lane == 2, npos_tot, 0.0)
           + jnp.where(lane == 3, nsel_tot, 0.0))
    out_ref[...] = vec.reshape(1, 1, 128).astype(f32)


def multibox_loss7_pallas(confidence, predicted_locations, labels, labels_mid,
                          labels_low, gt_locations,
                          neg_pos_ratio_mid=3.0, neg_pos_ratio_low=3.0):
    B, N, C = confidence.shape
    f32 = jnp.float32
    Np = ((N + 127) // 128) * 128

    # priors -> lane axis (lane-dense layout)
    conf_t = jnp.transpose(confidence.astype(f32), (0, 2, 1))            # (B,C,N)
    loc_t = jnp.transpose(predicted_locations.astype(f32), (0, 2, 1))    # (B,4,N)
    gt_t = jnp.transpose(gt_locations.astype(f32), (0, 2, 1))            # (B,4,N)
    lab_pack = jnp.stack([labels, labels_mid, labels_low],
                         axis=1).astype(jnp.int32)                       # (B,3,N)

    pad_n = Np - N
    if pad_n:
        conf_t = jnp.pad(conf_t, ((0, 0), (0, 0), (0, pad_n)))
        loc_t = jnp.pad(loc_t, ((0, 0), (0, 0), (0, pad_n)))
        gt_t = jnp.pad(gt_t, ((0, 0), (0, 0), (0, pad_n)))
        lab_pack = jnp.pad(lab_pack, ((0, 0), (0, 0), (0, pad_n)))       # labels -> 0

    idx_bits = max(1, (Np - 1).bit_length())
    kernel = functools.partial(_multibox_kernel,
                               float(neg_pos_ratio_mid),
                               float(neg_pos_ratio_low),
                               N, idx_bits)

    # One batch element per grid step: per-step VMEM (double-buffered) is only
    # ~(C+11)*Np*8 bytes (~6 MiB at C=81, N~8732), under every generation's
    # default scoped-VMEM limit, so no explicit vmem_limit_bytes is needed.
    out = pl.pallas_call(
        kernel,
        out_shape=jax.ShapeDtypeStruct((B, 1, 128), f32),
        grid_spec=pltpu.PrefetchScalarGridSpec(
            num_scalar_prefetch=0,
            grid=(B,),
            in_specs=[
                pl.BlockSpec((1, C, Np), lambda b: (b, 0, 0)),   # confidence
                pl.BlockSpec((1, 4, Np), lambda b: (b, 0, 0)),   # predicted locations
                pl.BlockSpec((1, 4, Np), lambda b: (b, 0, 0)),   # gt locations
                pl.BlockSpec((1, 3, Np), lambda b: (b, 0, 0)),   # labels / mid / low
            ],
            out_specs=pl.BlockSpec((1, 1, 128), lambda b: (b, 0, 0)),
        ),
        compiler_params=pltpu.CompilerParams(
            dimension_semantics=("parallel",)),
    )(conf_t, loc_t, gt_t, lab_pack)

    cls_tot = jnp.sum(out[:, 0, 0])
    sl1_tot = jnp.sum(out[:, 0, 1])
    npos_tot = jnp.sum(out[:, 0, 2])
    nsel_tot = jnp.sum(out[:, 0, 3])

    num_pos = npos_tot + 1e-6
    has_sel = nsel_tot > 0            # tmp_confidence.shape[0] == 0 branch -> zeros
    smooth_l1 = jnp.where(has_sel, sl1_tot / num_pos, 0.0)
    cls_loss = jnp.where(has_sel, cls_tot / num_pos, 0.0)
    return smooth_l1, cls_loss


class MultiboxLoss7:
    """JAX/Pallas port of the PyTorch MultiboxLoss7 module (forward only)."""

    def __init__(self, priors, neg_pos_ratio_mid, neg_pos_ratio_low,
                 center_variance, size_variance, device=None):
        # priors / variances kept for parity with the PyTorch module; they are
        # not used in the forward pass.
        self.priors = priors
        self.neg_pos_ratio_mid = neg_pos_ratio_mid
        self.neg_pos_ratio_low = neg_pos_ratio_low
        self.center_variance = center_variance
        self.size_variance = size_variance

    def __call__(self, confidence, predicted_locations, labels, labels_mid,
                 labels_low, gt_locations):
        return multibox_loss7_pallas(
            confidence, predicted_locations, labels, labels_mid, labels_low,
            gt_locations,
            neg_pos_ratio_mid=self.neg_pos_ratio_mid,
            neg_pos_ratio_low=self.neg_pos_ratio_low)


if __name__ == "__main__":
    B, N, C = 2, 256, 8   # batch, num_priors, num_classes

    key = jax.random.PRNGKey(0)
    k = jax.random.split(key, 9)

    confidence = jax.random.normal(k[0], (B, N, C), jnp.float32)
    predicted_locations = jax.random.normal(k[1], (B, N, 4), jnp.float32)
    gt_locations = jax.random.normal(k[2], (B, N, 4), jnp.float32)

    # sparse positive labels (0 = background)
    labels = jnp.where(jax.random.uniform(k[3], (B, N)) < 0.05,
                       jax.random.randint(k[4], (B, N), 1, C), 0).astype(jnp.int32)
    labels_mid = jnp.where(jax.random.uniform(k[5], (B, N)) < 0.05,
                           jax.random.randint(k[6], (B, N), 1, C), 0).astype(jnp.int32)
    labels_low = jnp.where(jax.random.uniform(k[7], (B, N)) < 0.05,
                           jax.random.randint(k[8], (B, N), 1, C), 0).astype(jnp.int32)

    # deterministic "priors" (unused in forward, shape-consistent with SSD)
    priors = jnp.linspace(0.0, 1.0, N * 4, dtype=jnp.float32).reshape(N, 4)

    criterion = MultiboxLoss7(priors,
                              neg_pos_ratio_mid=3.0,
                              neg_pos_ratio_low=3.0,
                              center_variance=0.1,
                              size_variance=0.2,
                              device=None)

    smooth_l1_loss, classification_loss = criterion(
        confidence, predicted_locations, labels, labels_mid, labels_low,
        gt_locations)

    jax.block_until_ready((smooth_l1_loss, classification_loss))
    print("KERNEL_OK")
</pallas_src>

<mosaic_0001>
module attributes {stable_mosaic.version = 11 : i64} {
  func.func @_multibox_kernel(%arg0: i32, %arg1: memref<1x8x256xf32, #tpu.memory_space<vmem>>, %arg2: memref<1x4x256xf32, #tpu.memory_space<vmem>>, %arg3: memref<1x4x256xf32, #tpu.memory_space<vmem>>, %arg4: memref<1x3x256xi32, #tpu.memory_space<vmem>>, %arg5: memref<1x1x128xf32, #tpu.memory_space<vmem>>) attributes {dimension_semantics = [#tpu.dimension_semantics<parallel>], iteration_bounds = array<i64: 2>, scalar_prefetch = 0 : i64, scratch_operands = 0 : i64, tpu.core_type = #tpu.core_type<tc>, window_params = [{transform_indices = @transform_0, window_bounds = array<i64: 1, 8, 256>}, {transform_indices = @transform_1, window_bounds = array<i64: 1, 4, 256>}, {transform_indices = @transform_2, window_bounds = array<i64: 1, 4, 256>}, {transform_indices = @transform_3, window_bounds = array<i64: 1, 3, 256>}, {transform_indices = @transform_4, window_bounds = array<i64: 1, 1, 128>}]} {
    %c0 = arith.constant 0 : index
    %c0_0 = arith.constant 0 : index
    %c0_1 = arith.constant 0 : index
    %0 = vector.load %arg1[%c0, %c0_0, %c0_1] : memref<1x8x256xf32, #tpu.memory_space<vmem>>, vector<1x8x256xf32>
    %1 = vector.shape_cast %0 : vector<1x8x256xf32> to vector<8x256xf32>
    %c0_2 = arith.constant 0 : index
    %c0_3 = arith.constant 0 : index
    %c0_4 = arith.constant 0 : index
    %2 = vector.load %arg2[%c0_2, %c0_3, %c0_4] : memref<1x4x256xf32, #tpu.memory_space<vmem>>, vector<1x4x256xf32>
    %3 = vector.shape_cast %2 : vector<1x4x256xf32> to vector<4x256xf32>
    %c0_5 = arith.constant 0 : index
    %c0_6 = arith.constant 0 : index
    %c0_7 = arith.constant 0 : index
    %4 = vector.load %arg3[%c0_5, %c0_6, %c0_7] : memref<1x4x256xf32, #tpu.memory_space<vmem>>, vector<1x4x256xf32>
    %5 = vector.shape_cast %4 : vector<1x4x256xf32> to vector<4x256xf32>
    %c0_8 = arith.constant 0 : index
    %c0_9 = arith.constant 0 : index
    %c0_10 = arith.constant 0 : index
    %6 = vector.load %arg4[%c0_8, %c0_9, %c0_10] : memref<1x3x256xi32, #tpu.memory_space<vmem>>, vector<1x3x256xi32>
    %7 = vector.shape_cast %6 : vector<1x3x256xi32> to vector<3x256xi32>
    %8 = tpu.iota {dimensions = array<i32: 1>} : vector<1x256xi32>
    %c256_i32 = arith.constant 256 : i32
    %9 = vector.broadcast %c256_i32 : i32 to vector<1x256xi32>
    %10 = arith.cmpi slt, %8, %9 : vector<1x256xi32>
    %11 = vector.extract_strided_slice %7 {offsets = [0, 0], sizes = [1, 256], strides = [1, 1]} : vector<3x256xi32> to vector<1x256xi32>
    %12 = vector.extract_strided_slice %7 {offsets = [1, 0], sizes = [1, 256], strides = [1, 1]} : vector<3x256xi32> to vector<1x256xi32>
    %13 = vector.extract_strided_slice %7 {offsets = [2, 0], sizes = [1, 256], strides = [1, 1]} : vector<3x256xi32> to vector<1x256xi32>
    %cst = arith.constant dense<0xFF800000> : vector<256xf32>
    %14 = vector.multi_reduction <maximumf>, %1, %cst [0] : vector<8x256xf32> to vector<256xf32>
    %15 = vector.shape_cast %14 : vector<256xf32> to vector<1x256xf32>
    %16 = vector.broadcast %15 : vector<1x256xf32> to vector<8x256xf32>
    %17 = arith.subf %1, %16 : vector<8x256xf32>
    %18 = math.exp %17 : vector<8x256xf32>
    %cst_11 = arith.constant dense<0.000000e+00> : vector<256xf32>
    %19 = vector.multi_reduction <add>, %18, %cst_11 [0] : vector<8x256xf32> to vector<256xf32>
    %20 = vector.shape_cast %19 : vector<256xf32> to vector<1x256xf32>
    %21 = math.log %20 : vector<1x256xf32>
    %22 = arith.addf %15, %21 : vector<1x256xf32>
    %23 = vector.extract_strided_slice %1 {offsets = [0, 0], sizes = [1, 256], strides = [1, 1]} : vector<8x256xf32> to vector<1x256xf32>
    %24 = arith.subf %22, %23 : vector<1x256xf32>
    %c0_i32 = arith.constant 0 : i32
    %25 = vector.broadcast %c0_i32 : i32 to vector<1x256xi32>
    %26 = arith.cmpi sgt, %11, %25 : vector<1x256xi32>
    %27 = arith.andi %26, %10 : vector<1x256xi1>
    %cst_12 = arith.constant dense<true> : vector<1x256xi1>
    %28 = arith.xori %27, %cst_12 : vector<1x256xi1>
    %29 = arith.andi %28, %10 : vector<1x256xi1>
    %30 = arith.extui %29 : vector<1x256xi1> to vector<1x256xi32>
    %31 = arith.sitofp %30 : vector<1x256xi32> to vector<1x256xf32>
    %32 = vector.shape_cast %31 : vector<1x256xf32> to vector<1x1x256xf32>
    %cst_13 = arith.constant dense<0.000000e+00> : vector<1xf32>
    %33 = vector.multi_reduction <add>, %32, %cst_13 [1, 2] : vector<1x1x256xf32> to vector<1xf32>
    %34 = vector.shape_cast %33 : vector<1xf32> to vector<1x1x1xf32>
    %35 = vector.extract %34[0, 0, 0] : f32 from vector<1x1x1xf32>
    %c0_i32_14 = arith.constant 0 : i32
    %36 = vector.broadcast %c0_i32_14 : i32 to vector<1x256xi32>
    %37 = arith.cmpi sgt, %12, %36 : vector<1x256xi32>
    %38 = arith.andi %37, %10 : vector<1x256xi1>
    %cst_15 = arith.constant 1.000000e+00 : f32
    %cst_16 = arith.constant 0.000000e+00 : f32
    %39 = vector.broadcast %cst_15 : f32 to vector<1x256xf32>
    %40 = vector.broadcast %cst_16 : f32 to vector<1x256xf32>
    %41 = arith.select %38, %39, %40 : vector<1x256xi1>, vector<1x256xf32>
    %42 = vector.shape_cast %41 : vector<1x256xf32> to vector<1x1x256xf32>
    %cst_17 = arith.constant dense<0.000000e+00> : vector<1xf32>
    %43 = vector.multi_reduction <add>, %42, %cst_17 [1, 2] : vector<1x1x256xf32> to vector<1xf32>
    %44 = vector.shape_cast %43 : vector<1xf32> to vector<1x1x1xf32>
    %45 = vector.extract %44[0, 0, 0] : f32 from vector<1x1x1xf32>
    %c0_i32_18 = arith.constant 0 : i32
    %46 = vector.broadcast %c0_i32_18 : i32 to vector<1x256xi32>
    %47 = arith.cmpi sgt, %13, %46 : vector<1x256xi32>
    %48 = arith.andi %47, %10 : vector<1x256xi1>
    %cst_19 = arith.constant 1.000000e+00 : f32
    %cst_20 = arith.constant 0.000000e+00 : f32
    %49 = vector.broadcast %cst_19 : f32 to vector<1x256xf32>
    %50 = vector.broadcast %cst_20 : f32 to vector<1x256xf32>
    %51 = arith.select %48, %49, %50 : vector<1x256xi1>, vector<1x256xf32>
    %52 = vector.shape_cast %51 : vector<1x256xf32> to vector<1x1x256xf32>
    %cst_21 = arith.constant dense<0.000000e+00> : vector<1xf32>
    %53 = vector.multi_reduction <add>, %52, %cst_21 [1, 2] : vector<1x1x256xf32> to vector<1xf32>
    %54 = vector.shape_cast %53 : vector<1xf32> to vector<1x1x1xf32>
    %55 = vector.extract %54[0, 0, 0] : f32 from vector<1x1x1xf32>
    %cst_22 = arith.constant 3.000000e+00 : f32
    %56 = arith.mulf %cst_22, %45 : f32
    %cst_23 = arith.constant 3.000000e+00 : f32
    %57 = arith.mulf %cst_23, %55 : f32
    %58 = arith.addf %56, %57 : f32
    %59 = math.floor %58 : f32
    %cst_24 = arith.constant 0.000000e+00 : f32
    %60 = arith.maximumf %cst_24, %59 : f32
    %61 = arith.minimumf %35, %60 : f32
    %cst_25 = arith.constant 0.000000e+00 : f32
    %62 = vector.broadcast %cst_25 : f32 to vector<1x256xf32>
    %63 = arith.maximumf %24, %62 : vector<1x256xf32>
    %64 = tpu.bitcast %63 : vector<1x256xf32> -> vector<1x256xi32>
    %cst_26 = arith.constant 1.000000e+00 : f32
    %65 = arith.maximumf %61, %cst_26 : f32
    %c0_i32_27 = arith.constant 0 : i32
    %c0_i32_28 = arith.constant 0 : i32
    %c1073741824_i32 = arith.constant 1073741824 : i32
    %c0_i32_29 = arith.constant 0 : i32
    %c31_i32 = arith.constant 31 : i32
    %66 = arith.addi %c0_i32_29, %c31_i32 : i32
    %c1_i32 = arith.constant 1 : i32
    %67:4 = scf.for %arg6 = %c0_i32_29 to %66 step %c1_i32 iter_args(%arg7 = %c0_i32_27, %arg8 = %c0_i32_28, %arg9 = %65, %arg10 = %c1073741824_i32) -> (i32, i32, f32, i32)  : i32 {
      %169 = vector.broadcast %arg8 : i32 to vector<1x256xi32>
      %170 = arith.andi %64, %169 : vector<1x256xi32>
      %171 = vector.broadcast %arg7 : i32 to vector<1x256xi32>
      %172 = arith.cmpi eq, %170, %171 : vector<1x256xi32>
      %173 = vector.broadcast %arg10 : i32 to vector<1x256xi32>
      %174 = arith.andi %64, %173 : vector<1x256xi32>
      %c0_i32_61 = arith.constant 0 : i32
      %175 = vector.broadcast %c0_i32_61 : i32 to vector<1x256xi32>
      %176 = arith.cmpi ne, %174, %175 : vector<1x256xi32>
      %177 = arith.andi %172, %176 : vector<1x256xi1>
      %cst_62 = arith.constant 0.000000e+00 : f32
      %178 = vector.broadcast %cst_62 : f32 to vector<1x256xf32>
      %179 = arith.select %177, %31, %178 : vector<1x256xi1>, vector<1x256xf32>
      %180 = vector.shape_cast %179 : vector<1x256xf32> to vector<1x1x256xf32>
      %cst_63 = arith.constant dense<0.000000e+00> : vector<1xf32>
      %181 = vector.multi_reduction <add>, %180, %cst_63 [1, 2] : vector<1x1x256xf32> to vector<1xf32>
      %182 = vector.shape_cast %181 : vector<1xf32> to vector<1x1x1xf32>
      %183 = vector.extract %182[0, 0, 0] : f32 from vector<1x1x1xf32>
      %184 = arith.cmpf oge, %183, %arg9 : f32
      %185 = arith.ori %arg7, %arg10 : i32
      %186 = arith.select %184, %185, %arg7 : i32
      %187 = arith.subf %arg9, %183 : f32
      %188 = arith.select %184, %arg9, %187 : f32
      %189 = arith.ori %arg8, %arg10 : i32
      %c1_i32_64 = arith.constant 1 : i32
      %190 = arith.shrsi %arg10, %c1_i32_64 : i32
      scf.yield %186, %189, %188, %190 : i32, i32, f32, i32
    }
    %68 = vector.broadcast %67#0 : i32 to vector<1x256xi32>
    %69 = arith.cmpi sgt, %64, %68 : vector<1x256xi32>
    %70 = arith.andi %29, %69 : vector<1x256xi1>
    %71 = vector.broadcast %67#0 : i32 to vector<1x256xi32>
    %72 = arith.cmpi eq, %64, %71 : vector<1x256xi32>
    %73 = arith.andi %29, %72 : vector<1x256xi1>
    %74 = arith.extui %70 : vector<1x256xi1> to vector<1x256xi32>
    %75 = arith.sitofp %74 : vector<1x256xi32> to vector<1x256xf32>
    %76 = vector.shape_cast %75 : vector<1x256xf32> to vector<1x1x256xf32>
    %cst_30 = arith.constant dense<0.000000e+00> : vector<1xf32>
    %77 = vector.multi_reduction <add>, %76, %cst_30 [1, 2] : vector<1x1x256xf32> to vector<1xf32>
    %78 = vector.shape_cast %77 : vector<1xf32> to vector<1x1x1xf32>
    %79 = vector.extract %78[0, 0, 0] : f32 from vector<1x1x1xf32>
    %80 = arith.subf %61, %79 : f32
    %c255_i32 = arith.constant 255 : i32
    %81 = vector.broadcast %c255_i32 : i32 to vector<1x256xi32>
    %82 = arith.subi %81, %8 : vector<1x256xi32>
    %83 = arith.extui %73 : vector<1x256xi1> to vector<1x256xi32>
    %84 = arith.sitofp %83 : vector<1x256xi32> to vector<1x256xf32>
    %cst_31 = arith.constant 1.000000e+00 : f32
    %85 = arith.maximumf %80, %cst_31 : f32
    %c0_i32_32 = arith.constant 0 : i32
    %c0_i32_33 = arith.constant 0 : i32
    %c128_i32 = arith.constant 128 : i32
    %c0_i32_34 = arith.constant 0 : i32
    %c8_i32 = arith.constant 8 : i32
    %86 = arith.addi %c0_i32_34, %c8_i32 : i32
    %c1_i32_35 = arith.constant 1 : i32
    %87:4 = scf.for %arg6 = %c0_i32_34 to %86 step %c1_i32_35 iter_args(%arg7 = %c0_i32_32, %arg8 = %c0_i32_33, %arg9 = %85, %arg10 = %c128_i32) -> (i32, i32, f32, i32)  : i32 {
      %169 = vector.broadcast %arg8 : i32 to vector<1x256xi32>
      %170 = arith.andi %82, %169 : vector<1x256xi32>
      %171 = vector.broadcast %arg7 : i32 to vector<1x256xi32>
      %172 = arith.cmpi eq, %170, %171 : vector<1x256xi32>
      %173 = vector.broadcast %arg10 : i32 to vector<1x256xi32>
      %174 = arith.andi %82, %173 : vector<1x256xi32>
      %c0_i32_61 = arith.constant 0 : i32
      %175 = vector.broadcast %c0_i32_61 : i32 to vector<1x256xi32>
      %176 = arith.cmpi ne, %174, %175 : vector<1x256xi32>
      %177 = arith.andi %172, %176 : vector<1x256xi1>
      %cst_62 = arith.constant 0.000000e+00 : f32
      %178 = vector.broadcast %cst_62 : f32 to vector<1x256xf32>
      %179 = arith.select %177, %84, %178 : vector<1x256xi1>, vector<1x256xf32>
      %180 = vector.shape_cast %179 : vector<1x256xf32> to vector<1x1x256xf32>
      %cst_63 = arith.constant dense<0.000000e+00> : vector<1xf32>
      %181 = vector.multi_reduction <add>, %180, %cst_63 [1, 2] : vector<1x1x256xf32> to vector<1xf32>
      %182 = vector.shape_cast %181 : vector<1xf32> to vector<1x1x1xf32>
      %183 = vector.extract %182[0, 0, 0] : f32 from vector<1x1x1xf32>
      %184 = arith.cmpf oge, %183, %arg9 : f32
      %185 = arith.ori %arg7, %arg10 : i32
      %186 = arith.select %184, %185, %arg7 : i32
      %187 = arith.subf %arg9, %183 : f32
      %188 = arith.select %184, %arg9, %187 : f32
      %189 = arith.ori %arg8, %arg10 : i32
      %c1_i32_64 = arith.constant 1 : i32
      %190 = arith.shrsi %arg10, %c1_i32_64 : i32
      scf.yield %186, %189, %188, %190 : i32, i32, f32, i32
    }
    %88 = vector.broadcast %87#0 : i32 to vector<1x256xi32>
    %89 = arith.cmpi sge, %82, %88 : vector<1x256xi32>
    %90 = arith.andi %73, %89 : vector<1x256xi1>
    %cst_36 = arith.constant 5.000000e-01 : f32
    %91 = arith.cmpf oge, %80, %cst_36 : f32
    %92 = vector.broadcast %91 : i1 to vector<1x256xi1>
    %93 = arith.andi %90, %92 : vector<1x256xi1>
    %94 = arith.ori %70, %93 : vector<1x256xi1>
    %95 = arith.ori %27, %94 : vector<1x256xi1>
    %96 = tpu.iota {dimensions = array<i32: 0>} : vector<8x256xi32>
    %97 = vector.broadcast %11 : vector<1x256xi32> to vector<8x256xi32>
    %98 = arith.cmpi eq, %96, %97 : vector<8x256xi32>
    %99 = arith.extui %98 : vector<8x256xi1> to vector<8x256xi32>
    %100 = arith.sitofp %99 : vector<8x256xi32> to vector<8x256xf32>
    %101 = arith.mulf %1, %100 : vector<8x256xf32>
    %cst_37 = arith.constant dense<0.000000e+00> : vector<256xf32>
    %102 = vector.multi_reduction <add>, %101, %cst_37 [0] : vector<8x256xf32> to vector<256xf32>
    %103 = vector.shape_cast %102 : vector<256xf32> to vector<1x256xf32>
    %104 = arith.subf %22, %103 : vector<1x256xf32>
    %cst_38 = arith.constant 0.000000e+00 : f32
    %105 = vector.broadcast %cst_38 : f32 to vector<1x256xf32>
    %106 = arith.select %95, %104, %105 : vector<1x256xi1>, vector<1x256xf32>
    %107 = vector.shape_cast %106 : vector<1x256xf32> to vector<1x1x256xf32>
    %cst_39 = arith.constant dense<0.000000e+00> : vector<1xf32>
    %108 = vector.multi_reduction <add>, %107, %cst_39 [1, 2] : vector<1x1x256xf32> to vector<1xf32>
    %109 = vector.shape_cast %108 : vector<1xf32> to vector<1x1x1xf32>
    %110 = vector.extract %109[0, 0, 0] : f32 from vector<1x1x1xf32>
    %111 = arith.subf %3, %5 : vector<4x256xf32>
    %112 = math.absf %111 : vector<4x256xf32>
    %cst_40 = arith.constant 1.000000e+00 : f32
    %113 = vector.broadcast %cst_40 : f32 to vector<4x256xf32>
    %114 = arith.cmpf olt, %112, %113 : vector<4x256xf32>
    %cst_41 = arith.constant 5.000000e-01 : f32
    %115 = vector.broadcast %cst_41 : f32 to vector<4x256xf32>
    %116 = arith.mulf %115, %111 : vector<4x256xf32>
    %117 = arith.mulf %116, %111 : vector<4x256xf32>
    %cst_42 = arith.constant 5.000000e-01 : f32
    %118 = vector.broadcast %cst_42 : f32 to vector<4x256xf32>
    %119 = arith.subf %112, %118 : vector<4x256xf32>
    %120 = arith.select %114, %117, %119 : vector<4x256xi1>, vector<4x256xf32>
    %cst_43 = arith.constant dense<0.000000e+00> : vector<256xf32>
    %121 = vector.multi_reduction <add>, %120, %cst_43 [0] : vector<4x256xf32> to vector<256xf32>
    %122 = vector.shape_cast %121 : vector<256xf32> to vector<1x256xf32>
    %cst_44 = arith.constant 0.000000e+00 : f32
    %123 = vector.broadcast %cst_44 : f32 to vector<1x256xf32>
    %124 = arith.select %27, %122, %123 : vector<1x256xi1>, vector<1x256xf32>
    %125 = vector.shape_cast %124 : vector<1x256xf32> to vector<1x1x256xf32>
    %cst_45 = arith.constant dense<0.000000e+00> : vector<1xf32>
    %126 = vector.multi_reduction <add>, %125, %cst_45 [1, 2] : vector<1x1x256xf32> to vector<1xf32>
    %127 = vector.shape_cast %126 : vector<1xf32> to vector<1x1x1xf32>
    %128 = vector.extract %127[0, 0, 0] : f32 from vector<1x1x1xf32>
    %cst_46 = arith.constant 1.000000e+00 : f32
    %cst_47 = arith.constant 0.000000e+00 : f32
    %129 = vector.broadcast %cst_46 : f32 to vector<1x256xf32>
    %130 = vector.broadcast %cst_47 : f32 to vector<1x256xf32>
    %131 = arith.select %27, %129, %130 : vector<1x256xi1>, vector<1x256xf32>
    %132 = vector.shape_cast %131 : vector<1x256xf32> to vector<1x1x256xf32>
    %cst_48 = arith.constant dense<0.000000e+00> : vector<1xf32>
    %133 = vector.multi_reduction <add>, %132, %cst_48 [1, 2] : vector<1x1x256xf32> to vector<1xf32>
    %134 = vector.shape_cast %133 : vector<1xf32> to vector<1x1x1xf32>
    %135 = vector.extract %134[0, 0, 0] : f32 from vector<1x1x1xf32>
    %cst_49 = arith.constant 1.000000e+00 : f32
    %cst_50 = arith.constant 0.000000e+00 : f32
    %136 = vector.broadcast %cst_49 : f32 to vector<1x256xf32>
    %137 = vector.broadcast %cst_50 : f32 to vector<1x256xf32>
    %138 = arith.select %95, %136, %137 : vector<1x256xi1>, vector<1x256xf32>
    %139 = vector.shape_cast %138 : vector<1x256xf32> to vector<1x1x256xf32>
    %cst_51 = arith.constant dense<0.000000e+00> : vector<1xf32>
    %140 = vector.multi_reduction <add>, %139, %cst_51 [1, 2] : vector<1x1x256xf32> to vector<1xf32>
    %141 = vector.shape_cast %140 : vector<1xf32> to vector<1x1x1xf32>
    %142 = vector.extract %141[0, 0, 0] : f32 from vector<1x1x1xf32>
    %143 = tpu.iota {dimensions = array<i32: 1>} : vector<1x128xi32>
    %c0_i32_52 = arith.constant 0 : i32
    %144 = vector.broadcast %c0_i32_52 : i32 to vector<1x128xi32>
    %145 = arith.cmpi eq, %143, %144 : vector<1x128xi32>
    %cst_53 = arith.constant 0.000000e+00 : f32
    %146 = vector.broadcast %110 : f32 to vector<1x128xf32>
    %147 = vector.broadcast %cst_53 : f32 to vector<1x128xf32>
    %148 = arith.select %145, %146, %147 : vector<1x128xi1>, vector<1x128xf32>
    %c1_i32_54 = arith.constant 1 : i32
    %149 = vector.broadcast %c1_i32_54 : i32 to vector<1x128xi32>
    %150 = arith.cmpi eq, %143, %149 : vector<1x128xi32>
    %cst_55 = arith.constant 0.000000e+00 : f32
    %151 = vector.broadcast %128 : f32 to vector<1x128xf32>
    %152 = vector.broadcast %cst_55 : f32 to vector<1x128xf32>
    %153 = arith.select %150, %151, %152 : vector<1x128xi1>, vector<1x128xf32>
    %154 = arith.addf %148, %153 : vector<1x128xf32>
    %c2_i32 = arith.constant 2 : i32
    %155 = vector.broadcast %c2_i32 : i32 to vector<1x128xi32>
    %156 = arith.cmpi eq, %143, %155 : vector<1x128xi32>
    %cst_56 = arith.constant 0.000000e+00 : f32
    %157 = vector.broadcast %135 : f32 to vector<1x128xf32>
    %158 = vector.broadcast %cst_56 : f32 to vector<1x128xf32>
    %159 = arith.select %156, %157, %158 : vector<1x128xi1>, vector<1x128xf32>
    %160 = arith.addf %154, %159 : vector<1x128xf32>
    %c3_i32 = arith.constant 3 : i32
    %161 = vector.broadcast %c3_i32 : i32 to vector<1x128xi32>
    %162 = arith.cmpi eq, %143, %161 : vector<1x128xi32>
    %cst_57 = arith.constant 0.000000e+00 : f32
    %163 = vector.broadcast %142 : f32 to vector<1x128xf32>
    %164 = vector.broadcast %cst_57 : f32 to vector<1x128xf32>
    %165 = arith.select %162, %163, %164 : vector<1x128xi1>, vector<1x128xf32>
    %166 = arith.addf %160, %165 : vector<1x128xf32>
    %167 = vector.shape_cast %166 : vector<1x128xf32> to vector<1x1x128xf32>
    %c0_58 = arith.constant 0 : index
    %c0_59 = arith.constant 0 : index
    %c0_60 = arith.constant 0 : index
    %168 = vector.load %arg5[%c0_58, %c0_59, %c0_60] : memref<1x1x128xf32, #tpu.memory_space<vmem>>, vector<1x1x128xf32>
    tpu.vector_store %arg5[%c0_58, %c0_59, %c0_60], %167 {strides = array<i32>} : memref<1x1x128xf32, #tpu.memory_space<vmem>>, vector<1x1x128xf32>,
    return
  }
  func.func @transform_0(%arg0: i32) -> (i32, i32, i32) {
    %c0_i32 = arith.constant 0 : i32
    %c0_i32_0 = arith.constant 0 : i32
    %c0_i32_1 = arith.constant 0 : i32
    return %arg0, %c0_i32, %c0_i32_0 : i32, i32, i32
  }
  func.func @transform_1(%arg0: i32) -> (i32, i32, i32) {
    %c0_i32 = arith.constant 0 : i32
    %c0_i32_0 = arith.constant 0 : i32
    %c0_i32_1 = arith.constant 0 : i32
    return %arg0, %c0_i32, %c0_i32_0 : i32, i32, i32
  }
  func.func @transform_2(%arg0: i32) -> (i32, i32, i32) {
    %c0_i32 = arith.constant 0 : i32
    %c0_i32_0 = arith.constant 0 : i32
    %c0_i32_1 = arith.constant 0 : i32
    return %arg0, %c0_i32, %c0_i32_0 : i32, i32, i32
  }
  func.func @transform_3(%arg0: i32) -> (i32, i32, i32) {
    %c0_i32 = arith.constant 0 : i32
    %c0_i32_0 = arith.constant 0 : i32
    %c0_i32_1 = arith.constant 0 : i32
    return %arg0, %c0_i32, %c0_i32_0 : i32, i32, i32
  }
  func.func @transform_4(%arg0: i32) -> (i32, i32, i32) {
    %c0_i32 = arith.constant 0 : i32
    %c0_i32_0 = arith.constant 0 : i32
    %c0_i32_1 = arith.constant 0 : i32
    return %arg0, %c0_i32, %c0_i32_0 : i32, i32, i32
  }
}

</mosaic_0001>

<llo_original>
// kernel: tpu_custom_call.1
$region0: #{tpu_custom_call.1}
  #allocation0 [shape = 'u32[]', space=smem, size = 0x4, offset = 0x4, fixed_abs, tag = 'smem constant byte address 0x4 - core index']
  #allocation1 [shape = 'u32[144,128]{1,0:T(1,128)}', space=vmem, size = 0x12000, scoped, tag = 'internal scratch']
  %s0 = inlined_call_operand.hbm [shape: f32[2,8,256], index: 0, kind: input, shape index: {}]
  %s1 = inlined_call_operand.vmem [shape: f32[2,4,256], index: 1, kind: input, shape index: {}]
  %s2 = inlined_call_operand.hbm [shape: f32[2,4,256], index: 2, kind: input, shape index: {}]
  %s3 = inlined_call_operand.vmem [shape: s32[2,3,256], index: 3, kind: input, shape index: {}]
  %s4 = inlined_call_operand.hbm [shape: f32[2,1,128], index: 4, kind: output, shape index: {}]
  %s5 = sld [smem:[#allocation0]]
  $region71: #{tpu_custom_call.1} parent=0
    _
  %s7 = ssub.s32 1, %s5
  %s8 = scalar_select 0, %s7, %s5
  $region1: #{tpu_custom_call.1} parent=0
    #allocation2 [shape = 'u8[16384]{0}', space=vmem, size = 0x4000, scoped, tag = 'input window, operand 0']
    #allocation3 [shape = 's32[2]{0}', space=sflag, size = 0x8, scoped, tag = 'scoped memory for tpu_custom_call.1']
    #allocation4 [shape = 's32[2]{0}', space=sflag, size = 0x8, scoped, tag = 'scoped memory for tpu_custom_call.1']
    #allocation5 [shape = 'u8[8192]{0}', space=vmem, size = 0x2000, scoped, tag = 'input window, operand 2']
    #allocation6 [shape = 's32[2]{0}', space=sflag, size = 0x8, scoped, tag = 'scoped memory for tpu_custom_call.1']
    #allocation7 [shape = 'u8[1024]{0}', space=vmem, size = 0x400, scoped, tag = 'output window, operand 0']
    %9 = vsyncpa [#allocation3], 0
    %s10 = scalar_lea.sflag [#allocation3], 1
    %11 = vsyncpa %s10, 0
    %12 = vsyncpa [#allocation6], 0
    %s13 = scalar_lea.sflag [#allocation6], 1
    %14 = vsyncpa %s13, 0
    %15 = vsyncpa [#allocation4], 0
    %s16 = scalar_lea.sflag [#allocation4], 1
    %17 = vsyncpa %s16, 0
    loop: start=0, step=1, limit=4
    $region2: #{tpu_custom_call.1} parent=1 // loop_pre_header
      _
    $region3: #{tpu_custom_call.1} parent=1 // loop_header
      %s19 = sphi 0, %s23
      %p20 = scmp.ge.s32.totalorder %s19, 4
      %s29 = sphi 0, %s31
      %s32 = sphi 0, %s29
      %s33 = sphi 0, %s32
      %s49 = sphi 0, %s33
      %s55 = sphi 0, %s57
      %s58 = sphi 0, %s55
      %s59 = sphi 0, %s58
      %s75 = sphi 0, %s59
      %s81 = sphi 0, %s83
      %s84 = sphi 0, %s81
      %s85 = sphi 0, %s84
      %s101 = sphi 0, %s85
      %s107 = sphi 0, %s109
      %s110 = sphi 0, %s107
      %s111 = sphi 0, %s110
      %s127 = sphi 0, %s111
      %s133 = sphi 0, %s135
      %s136 = sphi 0, %s133
      %s137 = sphi 0, %s136
      %s153 = sphi 0, %s137
    $region4: #{tpu_custom_call.1} parent=1 // loop_header_branch
      %22 = sbr.rel (%p20) target = $region8
    $region5: #{tpu_custom_call.1} parent=1 // loop_body
      %s24 = ssub.s32 %s19, 1
      %s25 = ssub.s32 %s19, 2
      %s26 = sadd.s32 %s19, 1
      %s27 = ssub.s32 %s19, %s26
      %p28 = scmp.eq.s32.totalorder %s27, 0
      %s30 = sadd.s32 %s29, 1
      %s31 = scalar_select %p28, %s29, %s30
      %p34 = pneg %p28
      %p35 = scmp.eq.s32.totalorder %s19, 1
      %p36 = por %p34, %p35
      %p37 = scmp.ne.s32.totalorder %s29, %s32
      %p38 = scmp.eq.s32.totalorder %s19, 0
      %p39 = por %p37, %p38
      %p40 = scmp.ne.s32.totalorder %s29, %s32
      %p41 = scmp.eq.s32.totalorder %s24, 1
      %p42 = por %p40, %p41
      %p43 = scmp.ne.s32.totalorder %s32, %s33
      %p44 = scmp.eq.s32.totalorder %s24, 0
      %p45 = por %p43, %p44
      %p46 = scmp.ne.s32.totalorder %s32, %s33
      %p47 = scmp.eq.s32.totalorder %s25, 1
      %p48 = por %p46, %p47
      %p50 = scmp.ne.s32.totalorder %s33, %s49
      %p51 = scmp.eq.s32.totalorder %s25, 0
      %p52 = por %p50, %p51
      %s53 = ssub.s32 %s19, %s26
      %p54 = scmp.eq.s32.totalorder %s53, 0
      %s56 = sadd.s32 %s55, 1
      %s57 = scalar_select %p54, %s55, %s56
      %p60 = pneg %p54
      %p61 = scmp.eq.s32.totalorder %s19, 1
      %p62 = por %p60, %p61
      %p63 = scmp.ne.s32.totalorder %s55, %s58
      %p64 = scmp.eq.s32.totalorder %s19, 0
      %p65 = por %p63, %p64
      %p66 = scmp.ne.s32.totalorder %s55, %s58
      %p67 = scmp.eq.s32.totalorder %s24, 1
      %p68 = por %p66, %p67
      %p69 = scmp.ne.s32.totalorder %s58, %s59
      %p70 = scmp.eq.s32.totalorder %s24, 0
      %p71 = por %p69, %p70
      %p72 = scmp.ne.s32.totalorder %s58, %s59
      %p73 = scmp.eq.s32.totalorder %s25, 1
      %p74 = por %p72, %p73
      %p76 = scmp.ne.s32.totalorder %s59, %s75
      %p77 = scmp.eq.s32.totalorder %s25, 0
      %p78 = por %p76, %p77
      %s79 = ssub.s32 %s19, %s26
      %p80 = scmp.eq.s32.totalorder %s79, 0
      %s82 = sadd.s32 %s81, 1
      %s83 = scalar_select %p80, %s81, %s82
      %p86 = pneg %p80
      %p87 = scmp.eq.s32.totalorder %s19, 1
      %p88 = por %p86, %p87
      %p89 = scmp.ne.s32.totalorder %s81, %s84
      %p90 = scmp.eq.s32.totalorder %s19, 0
      %p91 = por %p89, %p90
      %p92 = scmp.ne.s32.totalorder %s81, %s84
      %p93 = scmp.eq.s32.totalorder %s24, 1
      %p94 = por %p92, %p93
      %p95 = scmp.ne.s32.totalorder %s84, %s85
      %p96 = scmp.eq.s32.totalorder %s24, 0
      %p97 = por %p95, %p96
      %p98 = scmp.ne.s32.totalorder %s84, %s85
      %p99 = scmp.eq.s32.totalorder %s25, 1
      %p100 = por %p98, %p99
      %p102 = scmp.ne.s32.totalorder %s85, %s101
      %p103 = scmp.eq.s32.totalorder %s25, 0
      %p104 = por %p102, %p103
      %s105 = ssub.s32 %s19, %s26
      %p106 = scmp.eq.s32.totalorder %s105, 0
      %s108 = sadd.s32 %s107, 1
      %s109 = scalar_select %p106, %s107, %s108
      %p112 = pneg %p106
      %p113 = scmp.eq.s32.totalorder %s19, 1
      %p114 = por %p112, %p113
      %p115 = scmp.ne.s32.totalorder %s107, %s110
      %p116 = scmp.eq.s32.totalorder %s19, 0
      %p117 = por %p115, %p116
      %p118 = scmp.ne.s32.totalorder %s107, %s110
      %p119 = scmp.eq.s32.totalorder %s24, 1
      %p120 = por %p118, %p119
      %p121 = scmp.ne.s32.totalorder %s110, %s111
      %p122 = scmp.eq.s32.totalorder %s24, 0
      %p123 = por %p121, %p122
      %p124 = scmp.ne.s32.totalorder %s110, %s111
      %p125 = scmp.eq.s32.totalorder %s25, 1
      %p126 = por %p124, %p125
      %p128 = scmp.ne.s32.totalorder %s111, %s127
      %p129 = scmp.eq.s32.totalorder %s25, 0
      %p130 = por %p128, %p129
      %s131 = ssub.s32 %s19, %s26
      %p132 = scmp.eq.s32.totalorder %s131, 0
      %s134 = sadd.s32 %s133, 1
      %s135 = scalar_select %p132, %s133, %s134
      %p138 = pneg %p132
      %p139 = scmp.eq.s32.totalorder %s19, 1
      %p140 = por %p138, %p139
      %p141 = scmp.ne.s32.totalorder %s133, %s136
      %p142 = scmp.eq.s32.totalorder %s19, 0
      %p143 = por %p141, %p142
      %p144 = scmp.ne.s32.totalorder %s133, %s136
      %p145 = scmp.eq.s32.totalorder %s24, 1
      %p146 = por %p144, %p145
      %p147 = scmp.ne.s32.totalorder %s136, %s137
      %p148 = scmp.eq.s32.totalorder %s24, 0
      %p149 = por %p147, %p148
      %p150 = scmp.ne.s32.totalorder %s136, %s137
      %p151 = scmp.eq.s32.totalorder %s25, 1
      %p152 = por %p150, %p151
      %p154 = scmp.ne.s32.totalorder %s137, %s153
      %p155 = scmp.eq.s32.totalorder %s25, 0
      %p156 = por %p154, %p155
      %p157 = scmp.le.s32.totalorder 1, %s19
      %p158 = scmp.lt.s32.totalorder %s19, 3
      %p159 = pnand %p157, %p158
      %p160 = pneg %p159
      // Predicated region
      $region9: #{tpu_custom_call.1} parent=5 // pred_check
        _
      $region10: #{tpu_custom_call.1} parent=5 // pred_check_branch
        %162 = sbr.rel (%p159) target = $region12
      $region11: #{tpu_custom_call.1} parent=5 // pred_region
        %s163 = ssub.s32 %s19, 1
      $region12: #{tpu_custom_call.1} parent=5 // pred_fallthru
        _
      %p164 = scmp.lt.s32.totalorder %s19, 2
      // Predicated region
      $region13: #{tpu_custom_call.1} parent=5 // pred_check
        %p165 = pneg %p164
      $region14: #{tpu_custom_call.1} parent=5 // pred_check_branch
        %167 = sbr.rel (%p165) target = $region16
      $region15: #{tpu_custom_call.1} parent=5 // pred_region
        // Predicated region
        $region17: #{tpu_custom_call.1} parent=15 // pred_check
          %p168 = pneg %p39
        $region18: #{tpu_custom_call.1} parent=15 // pred_check_branch
          %170 = sbr.rel (%p168) target = $region20
        $region19: #{tpu_custom_call.1} parent=15 // pred_region
          %s171 = sand.u32 %s29, 1
          %s172 = scalar_lea.sflag [#allocation3], %s171
          %s173 = sand.u32 %s29, 1
          %s174 = smul.addr %s173, 16
          %s175 = scalar_lea.vmem [#allocation2], %s174
          %s177 = ssub.s32 256, 256
          %178 = vsyncadd %s172, %s177
          %s179 = smul.addr %s19, 2
          %s180 = smul.addr %s179, 128
          %s181 = scalar_lea.hbm %s0, %s180
          %s183 = sshll.u32 %s175, 4
          %s184 = int_to_ptr.vmem [resolvable:$true] %s183
          %186 = dma.hbm_to_vmem [thread:$0]  %s181, 256, %s184, %s172
        $region20: #{tpu_custom_call.1} parent=15 // pred_fallthru
          _
        // Predicated region
        $region21: #{tpu_custom_call.1} parent=15 // pred_check
          %p187 = pneg %p65
        $region22: #{tpu_custom_call.1} parent=15 // pred_check_branch
          %189 = sbr.rel (%p187) target = $region24
        $region23: #{tpu_custom_call.1} parent=15 // pred_region
          %p190 = scmp.lt.s32.totalorder %s19, 1
          %s191 = scalar_select %p190, %s19, 1
          %s192 = smul.addr %s191, 2
          %s193 = smul.addr %s192, 4
          %s194 = scalar_lea.vmem %s1, %s193
        $region24: #{tpu_custom_call.1} parent=15 // pred_fallthru
          _
        // Predicated region
        $region25: #{tpu_custom_call.1} parent=15 // pred_check
          %p195 = pneg %p91
        $region26: #{tpu_custom_call.1} parent=15 // pred_check_branch
          %197 = sbr.rel (%p195) target = $region28
        $region27: #{tpu_custom_call.1} parent=15 // pred_region
          %s198 = sand.u32 %s81, 1
          %s199 = scalar_lea.sflag [#allocation6], %s198
          %s200 = sand.u32 %s81, 1
          %s201 = smul.addr %s200, 8
          %s202 = scalar_lea.vmem [#allocation5], %s201
          %s204 = ssub.s32 128, 128
          %205 = vsyncadd %s199, %s204
          %s206 = smul.addr %s19, 2
          %s207 = smul.addr %s206, 64
          %s208 = scalar_lea.hbm %s2, %s207
          %s210 = sshll.u32 %s202, 4
          %s211 = int_to_ptr.vmem [resolvable:$true] %s210
          %213 = dma.hbm_to_vmem [thread:$0]  %s208, 128, %s211, %s199
        $region28: #{tpu_custom_call.1} parent=15 // pred_fallthru
          _
        // Predicated region
        $region29: #{tpu_custom_call.1} parent=15 // pred_check
          %p214 = pneg %p117
        $region30: #{tpu_custom_call.1} parent=15 // pred_check_branch
          %216 = sbr.rel (%p214) target = $region32
        $region31: #{tpu_custom_call.1} parent=15 // pred_region
          %p217 = scmp.lt.s32.totalorder %s19, 1
          %s218 = scalar_select %p217, %s19, 1
          %s219 = smul.addr %s218, 2
          %s220 = smul.addr %s219, 4
          %s221 = scalar_lea.vmem %s3, %s220
        $region32: #{tpu_custom_call.1} parent=15 // pred_fallthru
          _
      $region16: #{tpu_custom_call.1} parent=5 // pred_fallthru
        _
      %p222 = scmp.le.s32.totalorder 1, %s19
      %p223 = scmp.lt.s32.totalorder %s19, 3
      %p224 = pnand %p222, %p223
      %p225 = pneg %p224
      // Predicated region
      $region33: #{tpu_custom_call.1} parent=5 // pred_check
        _
      $region34: #{tpu_custom_call.1} parent=5 // pred_check_branch
        %227 = sbr.rel (%p224) target = $region36
      $region35: #{tpu_custom_call.1} parent=5 // pred_region
        %s228 = ssub.s32 %s19, 1
        %s229 = sand.u32 %s32, 1
        %s230 = scalar_lea.sflag [#allocation3], %s229
        %s231 = sand.u32 %s32, 1
        %s232 = smul.addr %s231, 16
        %s233 = scalar_lea.vmem [#allocation2], %s232
        // Predicated region
        $region37: #{tpu_custom_call.1} parent=35 // pred_check
          %p234 = pneg %p45
        $region38: #{tpu_custom_call.1} parent=35 // pred_check_branch
          %236 = sbr.rel (%p234) target = $region40
        $region39: #{tpu_custom_call.1} parent=35 // pred_region
          %237 = dma.done %s230, 256
        $region40: #{tpu_custom_call.1} parent=35 // pred_fallthru
          _
        %s238 = sand.u32 %s84, 1
        %s239 = scalar_lea.sflag [#allocation6], %s238
        %s240 = sand.u32 %s84, 1
        %s241 = smul.addr %s240, 8
        %s242 = scalar_lea.vmem [#allocation5], %s241
        // Predicated region
        $region41: #{tpu_custom_call.1} parent=35 // pred_check
          %p243 = pneg %p97
        $region42: #{tpu_custom_call.1} parent=35 // pred_check_branch
          %245 = sbr.rel (%p243) target = $region44
        $region43: #{tpu_custom_call.1} parent=35 // pred_region
          %246 = dma.done %s239, 128
        $region44: #{tpu_custom_call.1} parent=35 // pred_fallthru
          _
        %s247 = sand.u32 %s32, 1
        %s248 = scalar_lea.sflag [#allocation3], %s247
        %s249 = sand.u32 %s32, 1
        %s250 = smul.addr %s249, 16
        %s251 = scalar_lea.vmem [#allocation2], %s250
        %p252 = pneg %p45
        %p253 = pneg %p42
        %p254 = scmp.lt.s32.totalorder %s24, 1
        %s255 = scalar_select %p254, %s24, 1
        %s256 = smul.addr %s255, 2
        %s257 = smul.addr %s256, 4
        %s258 = scalar_lea.vmem %s1, %s257
        %p259 = pneg %p71
        %p260 = pneg %p68
        %s261 = sand.u32 %s84, 1
        %s262 = scalar_lea.sflag [#allocation6], %s261
        %s263 = sand.u32 %s84, 1
        %s264 = smul.addr %s263, 8
        %s265 = scalar_lea.vmem [#allocation5], %s264
        %p266 = pneg %p97
        %p267 = pneg %p94
        %p268 = scmp.lt.s32.totalorder %s24, 1
        %s269 = scalar_select %p268, %s24, 1
        %s270 = smul.addr %s269, 2
        %s271 = smul.addr %s270, 4
        %s272 = scalar_lea.vmem %s3, %s271
        %p273 = pneg %p123
        %p274 = pneg %p120
        %p275 = pneg %p149
        %p276 = pneg %p146
        %s277 = sand.u32 %s136, 1
        %s278 = scalar_lea.sflag [#allocation4], %s277
        %s279 = sand.u32 %s136, 1
        %s280 = scalar_lea.vmem [#allocation7], %s279
        %p281 = scmp.lt.s32.totalorder %s24, 1
        %s282 = scalar_select %p281, %s24, 1
        %s283 = smul.addr %s282, 2
        %s284 = smul.addr %s283, 4
        %s285 = scalar_lea.vmem %s1, %s284
        %p286 = scmp.lt.s32.totalorder %s24, 1
        %s287 = scalar_select %p286, %s24, 1
        %s288 = smul.addr %s287, 2
        %s289 = smul.addr %s288, 4
        %s290 = scalar_lea.vmem %s3, %s289
        %v291 = vld [vmem:[%s233] sm:$0xff]
        %v292 = vld [vmem:[%s233 + $0x8] sm:$0xff]
        %v293 = vld [vmem:[%s285] sm:$0xff]
        %v294 = vld [vmem:[%s242] sm:$0xff]
        %v295 = vld [vmem:[%s290] sm:$0x77]
        %v296 = vlaneseq
        %v297 = vand.u32 %v296, 127
        %v298 = vadd.s32 %v297, 128
        %vm299 = vcmp.lt.s32.totalorder %v297, 256
        %vm300 = vcmp.lt.s32.totalorder %v298, 256
        %v301 = vrot.slane %v291, 4
        %v302 = vmax.f32 %v291, %v301
        %v303 = vrot.slane %v302, 2
        %v304 = vmax.f32 %v302, %v303
        %v305 = vrot.slane %v304, 1
        %v306 = vmax.f32 %v304, %v305
        %v307 = vrot.slane %v292, 4
        %v308 = vmax.f32 %v292, %v307
        %v309 = vrot.slane %v308, 2
        %v310 = vmax.f32 %v308, %v309
        %v311 = vrot.slane %v310, 1
        %v312 = vmax.f32 %v310, %v311
        %v313 = vsub.f32 %v291, %v306
        %v314 = vsub.f32 %v292, %v312
        %v315 = vmul.f32 %v313, 1.442695
        %v316 = vpow.pop %v315
        %v317 = vmul.f32 %v314, 1.442695
        %v318 = vpow.pop %v317
        %v319 = vrot.slane %v316, 4
        %v320 = vadd.f32 %v316, %v319
        %v321 = vrot.slane %v320, 2
        %v322 = vadd.f32 %v320, %v321
        %v323 = vrot.slane %v322, 1
        %v324 = vadd.f32 %v322, %v323
        %v325 = vrot.slane %v318, 4
        %v326 = vadd.f32 %v318, %v325
        %v327 = vrot.slane %v326, 2
        %v328 = vadd.f32 %v326, %v327
        %v329 = vrot.slane %v328, 1
        %v330 = vadd.f32 %v328, %v329
        %v331 = vlog2.pop %v324
        %v332 = vmul.f32 %v331, 0.6931472
        %v333 = vlog2.pop %v330
        %v334 = vmul.f32 %v333, 0.6931472
        %v335 = vadd.f32 %v306, %v332
        %v336 = vadd.f32 %v312, %v334
        %v337 = vsub.f32 %v335, %v291
        %v338 = vsub.f32 %v336, %v292
        %vm339 = vcmp.gt.s32.totalorder %v295, 0
        %v340 = vsel %vm299, 1, 0
        %v341 = vsel %vm300, 1, 0
        %v342 = vcombine.low %v340, %v341
        %vm343 = vcmp.ne.s32.totalorder %v342, 0
        %vm344 = vmand %vm339, %vm343
        %vm345 = vmxor %vm344, 1
        %vm346 = vmand %vm345, %vm343
        %v347 = vsel %vm346, 1, 0
        %v348 = vcvt.s32.f32 %v347
        %v350 = vlaneseq
        %v351 = vshrl.u32 %v350, 7
        %v352 = vsub.s32 0, %v351
        %v353 = vrot.slane %v348, %v352
        %v354 = vlaneseq
        %v355 = vshrl.u32 %v354, 7
        %v356 = vsub.s32 4, %v355
        %v357 = vrot.slane %v348, %v356
        %vm360 = vcmask 1040384
        %v361 = vsel %vm360, %v353, 0.0
        %v362 = vsel %vm360, %v357, 0.0
        %v363 = vadd.f32 %v361, %v362
        %364 = vadd.xlane.f32.xlu0 %v363
        %v365 = vpop.xlane.xlu0 %364
        %v366 = vrot.slane %v365, 4
        %v367 = vadd.f32 %v365, %v366
        %v368 = vrot.slane %v367, 2
        %v369 = vadd.f32 %v367, %v368
        %v370 = vrot.slane %v369, 1
        %v371 = vadd.f32 %v369, %v370
        %s372 = vtos %v371
        %v373 = vrot.slane %v342, 7
        %vm374 = vcmp.ne.s32.totalorder %v373, 0
        %vm375 = vmand %vm339, %vm374
        %v376 = vsel %vm375, 1.0, 0.0
        %v378 = vlaneseq
        %v379 = vshrl.u32 %v378, 7
        %v380 = vsub.s32 1, %v379
        %v381 = vrot.slane %v376, %v380
        %v382 = vlaneseq
        %v383 = vshrl.u32 %v382, 7
        %v384 = vsub.s32 5, %v383
        %v385 = vrot.slane %v376, %v384
        %v388 = vsel %vm360, %v381, 0.0
        %v389 = vsel %vm360, %v385, 0.0
        %v390 = vadd.f32 %v388, %v389
        %391 = vadd.xlane.f32.xlu0 %v390
        %v392 = vpop.xlane.xlu0 %391
        %v393 = vrot.slane %v392, 4
        %v394 = vadd.f32 %v392, %v393
        %v395 = vrot.slane %v394, 2
        %v396 = vadd.f32 %v394, %v395
        %v397 = vrot.slane %v396, 1
        %v398 = vadd.f32 %v396, %v397
        %s399 = vtos %v398
        %v400 = vrot.slane %v342, 6
        %vm401 = vcmp.ne.s32.totalorder %v400, 0
        %vm402 = vmand %vm339, %vm401
        %v403 = vsel %vm402, 1.0, 0.0
        %v405 = vlaneseq
        %v406 = vshrl.u32 %v405, 7
        %v407 = vsub.s32 2, %v406
        %v408 = vrot.slane %v403, %v407
        %v409 = vlaneseq
        %v410 = vshrl.u32 %v409, 7
        %v411 = vsub.s32 6, %v410
        %v412 = vrot.slane %v403, %v411
        %v415 = vsel %vm360, %v408, 0.0
        %v416 = vsel %vm360, %v412, 0.0
        %v417 = vadd.f32 %v415, %v416
        %418 = vadd.xlane.f32.xlu0 %v417
        %v419 = vpop.xlane.xlu0 %418
        %v420 = vrot.slane %v419, 4
        %v421 = vadd.f32 %v419, %v420
        %v422 = vrot.slane %v421, 2
        %v423 = vadd.f32 %v421, %v422
        %v424 = vrot.slane %v423, 1
        %v425 = vadd.f32 %v423, %v424
        %s426 = vtos %v425
        %s427 = smul.f32 %s399, 3.0
        %s428 = smul.f32 %s426, 3.0
        %s429 = sadd.f32 %s427, %s428
        %s430 = sfloor.f32 %s429
        %s431 = smax.f32 %s430, 0.0
        %s432 = smin.f32 %s372, %s431
        %v433 = vmax.f32 %v337, 0.0
        %v434 = vmax.f32 %v338, 0.0
        %s437 = smax.f32 %s432, 1.0
        loop: start=0, step=1, limit=31
        $region45: #{tpu_custom_call.1} parent=35 // loop_pre_header
          _
        $region46: #{tpu_custom_call.1} parent=35 // loop_header
          %s439 = sphi 0, %s443
          %p440 = scmp.ge.s32.totalorder %s439, 31
          %s444 = sphi 0, %s477
          %s445 = sphi 0, %s480
          %s446 = sphi %s437, %s479
          %s447 = sphi 1073741824, %s481
        $region47: #{tpu_custom_call.1} parent=35 // loop_header_branch
          %442 = sbr.rel (%p440) target = $region51
        $region48: #{tpu_custom_call.1} parent=35 // loop_body
          %v448 = vstv %s445
          %v449 = vand.u32 %v433, %v448
          %v450 = vand.u32 %v434, %v448
          %v451 = vstv %s444
          %vm452 = vcmp.eq.s32.totalorder %v449, %v451
          %vm453 = vcmp.eq.s32.totalorder %v450, %v451
          %v454 = vstv %s447
          %v455 = vand.u32 %v433, %v454
          %v456 = vand.u32 %v434, %v454
          %vm457 = vcmp.ne.s32.totalorder %v455, 0
          %vm458 = vcmp.ne.s32.totalorder %v456, 0
          %vm459 = vmand %vm452, %vm457
          %vm460 = vmand %vm453, %vm458
          %v461 = vsel %vm459, %v353, 0.0
          %v462 = vsel %vm460, %v357, 0.0
          %v463 = vsel %vm360, %v461, 0.0
          %v464 = vsel %vm360, %v462, 0.0
          %v465 = vadd.f32 %v463, %v464
          %466 = vadd.xlane.f32.xlu0 %v465
          %v467 = vpop.xlane.xlu0 %466
          %v468 = vrot.slane %v467, 4
          %v469 = vadd.f32 %v467, %v468
          %v470 = vrot.slane %v469, 2
          %v471 = vadd.f32 %v469, %v470
          %v472 = vrot.slane %v471, 1
          %v473 = vadd.f32 %v471, %v472
          %s474 = vtos %v473
          %p475 = scmp.ge.f32.partialorder %s474, %s446
          %s476 = sor.u32 %s444, %s447
          %s477 = scalar_select %p475, %s476, %s444
          %s478 = ssub.f32 %s446, %s474
          %s479 = scalar_select %p475, %s446, %s478
          %s480 = sor.u32 %s445, %s447
          %s481 = sshra.s32 %s447, 1
        $region49: #{tpu_custom_call.1} parent=35 // loop_footer
          %s443 = sadd.s32 1, %s439
        $region50: #{tpu_custom_call.1} parent=35 // loop_footer_branch
          %438 = sbr.rel target = $region46
        $region51: #{tpu_custom_call.1} parent=35 // loop_exit
          _
        %v482 = vstv %s444
        %vm483 = vcmp.gt.s32.totalorder %v433, %v482
        %vm484 = vcmp.gt.s32.totalorder %v434, %v482
        %v485 = vsel %vm483, 1, 0
        %v486 = vsel %vm484, 1, 0
        %v487 = vcombine.low %v485, %v486
        %vm488 = vcmp.ne.s32.totalorder %v487, 0
        %vm489 = vmand %vm346, %vm488
        %vm490 = vcmp.eq.s32.totalorder %v433, %v482
        %vm491 = vcmp.eq.s32.totalorder %v434, %v482
        %v492 = vsel %vm490, 1, 0
        %v493 = vsel %vm491, 1, 0
        %v494 = vcombine.low %v492, %v493
        %vm495 = vcmp.ne.s32.totalorder %v494, 0
        %vm496 = vmand %vm346, %vm495
        %v497 = vsel %vm489, 1, 0
        %v498 = vcvt.s32.f32 %v497
        %v500 = vlaneseq
        %v501 = vshrl.u32 %v500, 7
        %v502 = vsub.s32 0, %v501
        %v503 = vrot.slane %v498, %v502
        %v504 = vlaneseq
        %v505 = vshrl.u32 %v504, 7
        %v506 = vsub.s32 4, %v505
        %v507 = vrot.slane %v498, %v506
        %v510 = vsel %vm360, %v503, 0.0
        %v511 = vsel %vm360, %v507, 0.0
        %v512 = vadd.f32 %v510, %v511
        %513 = vadd.xlane.f32.xlu0 %v512
        %v514 = vpop.xlane.xlu0 %513
        %v515 = vrot.slane %v514, 4
        %v516 = vadd.f32 %v514, %v515
        %v517 = vrot.slane %v516, 2
        %v518 = vadd.f32 %v516, %v517
        %v519 = vrot.slane %v518, 1
        %v520 = vadd.f32 %v518, %v519
        %s521 = vtos %v520
        %s522 = ssub.f32 %s432, %s521
        %v523 = vsub.s32 255, %v297
        %v524 = vsub.s32 255, %v298
        %v525 = vsel %vm496, 1, 0
        %v526 = vcvt.s32.f32 %v525
        %s527 = smax.f32 %s522, 1.0
        loop: start=0, step=1, limit=8
        $region52: #{tpu_custom_call.1} parent=35 // loop_pre_header
          _
        $region53: #{tpu_custom_call.1} parent=35 // loop_header
          %s529 = sphi 0, %s533
          %p530 = scmp.ge.s32.totalorder %s529, 8
          %s534 = sphi 0, %s578
          %s535 = sphi 0, %s581
          %s536 = sphi %s527, %s580
          %s537 = sphi 128, %s582
        $region54: #{tpu_custom_call.1} parent=35 // loop_header_branch
          %532 = sbr.rel (%p530) target = $region58
        $region55: #{tpu_custom_call.1} parent=35 // loop_body
          %v538 = vstv %s535
          %v539 = vand.u32 %v523, %v538
          %v540 = vand.u32 %v524, %v538
          %v541 = vstv %s534
          %vm542 = vcmp.eq.s32.totalorder %v539, %v541
          %vm543 = vcmp.eq.s32.totalorder %v540, %v541
          %v544 = vstv %s537
          %v545 = vand.u32 %v523, %v544
          %v546 = vand.u32 %v524, %v544
          %vm547 = vcmp.ne.s32.totalorder %v545, 0
          %vm548 = vcmp.ne.s32.totalorder %v546, 0
          %vm549 = vmand %vm542, %vm547
          %vm550 = vmand %vm543, %vm548
          %v552 = vlaneseq
          %v553 = vshrl.u32 %v552, 7
          %v554 = vsub.s32 0, %v553
          %v555 = vrot.slane %v526, %v554
          %v556 = vlaneseq
          %v557 = vshrl.u32 %v556, 7
          %v558 = vsub.s32 4, %v557
          %v559 = vrot.slane %v526, %v558
          %v562 = vsel %vm549, %v555, 0.0
          %v563 = vsel %vm550, %v559, 0.0
          %v564 = vsel %vm360, %v562, 0.0
          %v565 = vsel %vm360, %v563, 0.0
          %v566 = vadd.f32 %v564, %v565
          %567 = vadd.xlane.f32.xlu0 %v566
          %v568 = vpop.xlane.xlu0 %567
          %v569 = vrot.slane %v568, 4
          %v570 = vadd.f32 %v568, %v569
          %v571 = vrot.slane %v570, 2
          %v572 = vadd.f32 %v570, %v571
          %v573 = vrot.slane %v572, 1
          %v574 = vadd.f32 %v572, %v573
          %s575 = vtos %v574
          %p576 = scmp.ge.f32.partialorder %s575, %s536
          %s577 = sor.u32 %s534, %s537
          %s578 = scalar_select %p576, %s577, %s534
          %s579 = ssub.f32 %s536, %s575
          %s580 = scalar_select %p576, %s536, %s579
          %s581 = sor.u32 %s535, %s537
          %s582 = sshra.s32 %s537, 1
        $region56: #{tpu_custom_call.1} parent=35 // loop_footer
          %s533 = sadd.s32 1, %s529
        $region57: #{tpu_custom_call.1} parent=35 // loop_footer_branch
          %528 = sbr.rel target = $region53
        $region58: #{tpu_custom_call.1} parent=35 // loop_exit
          _
        %v583 = vstv %s534
        %vm584 = vcmp.ge.s32.totalorder %v523, %v583
        %vm585 = vcmp.ge.s32.totalorder %v524, %v583
        %v586 = vsel %vm584, 1, 0
        %v587 = vsel %vm585, 1, 0
        %v588 = vcombine.low %v586, %v587
        %vm589 = vcmp.ne.s32.totalorder %v588, 0
        %vm590 = vmand %vm496, %vm589
        %p591 = scmp.ge.f32.partialorder %s522, 0.5
        %s592 = scalar_select %p591, 1, 0
        %v593 = vstv %s592
        %vm594 = vcmp.eq.s32.totalorder %v593, 1
        %vm595 = vmand %vm590, %vm594
        %vm596 = vmor %vm489, %vm595
        %vm597 = vmor %vm344, %vm596
        %v598 = vlaneseq
        %v599 = vshrl.u32 %v598, 7
        %v600 = vlaneseq
        %v601 = vshrl.u32 %v600, 7
        %v602 = vsub.s32 0, %v601
        %v603 = vrot.slane %v295, %v602
        %v604 = vlaneseq
        %v605 = vshrl.u32 %v604, 7
        %v606 = vsub.s32 4, %v605
        %v607 = vrot.slane %v295, %v606
        %v608 = vlaneseq
        %v609 = vshrl.u32 %v608, 7
        %v610 = vsub.s32 0, %v609
        %v611 = vrot.slane %v603, %v610
        %v612 = vlaneseq
        %v613 = vshrl.u32 %v612, 7
        %v614 = vsub.s32 0, %v613
        %v615 = vrot.slane %v607, %v614
        %vm616 = vcmp.eq.s32.totalorder %v599, %v611
        %vm617 = vcmp.eq.s32.totalorder %v599, %v615
        %v618 = vsel %vm616, 1, 0
        %v619 = vsel %vm617, 1, 0
        %v620 = vcvt.s32.f32 %v618
        %v621 = vcvt.s32.f32 %v619
        %v622 = vmul.f32 %v291, %v620
        %v623 = vmul.f32 %v292, %v621
        %v624 = vrot.slane %v622, 4
        %v625 = vadd.f32 %v622, %v624
        %v626 = vrot.slane %v625, 2
        %v627 = vadd.f32 %v625, %v626
        %v628 = vrot.slane %v627, 1
        %v629 = vadd.f32 %v627, %v628
        %v630 = vrot.slane %v623, 4
        %v631 = vadd.f32 %v623, %v630
        %v632 = vrot.slane %v631, 2
        %v633 = vadd.f32 %v631, %v632
        %v634 = vrot.slane %v633, 1
        %v635 = vadd.f32 %v633, %v634
        %v636 = vsub.f32 %v335, %v629
        %v637 = vsub.f32 %v336, %v635
        %v640 = vcombine.low %v636, %v637
        %v642 = vsel %vm597, %v640, 0.0
        %v644 = vlaneseq
        %v645 = vshrl.u32 %v644, 7
        %v646 = vsub.s32 0, %v645
        %v647 = vrot.slane %v642, %v646
        %v648 = vlaneseq
        %v649 = vshrl.u32 %v648, 7
        %v650 = vsub.s32 4, %v649
        %v651 = vrot.slane %v642, %v650
        %v654 = vsel %vm360, %v647, 0.0
        %v655 = vsel %vm360, %v651, 0.0
        %v656 = vadd.f32 %v654, %v655
        %657 = vadd.xlane.f32.xlu0 %v656
        %v658 = vpop.xlane.xlu0 %657
        %v659 = vrot.slane %v658, 4
        %v660 = vadd.f32 %v658, %v659
        %v661 = vrot.slane %v660, 2
        %v662 = vadd.f32 %v660, %v661
        %v663 = vrot.slane %v662, 1
        %v664 = vadd.f32 %v662, %v663
        %s665 = vtos %v664
        %v666 = vsub.f32 %v293, %v294
        %v667 = vand.u32 2147483647, %v666
        %vm668 = vcmp.lt.f32.partialorder %v667, 1.0
        %v669 = vmul.f32 %v666, 0.5
        %v670 = vmul.f32 %v669, %v666
        %v671 = vsub.f32 %v667, 0.5
        %v672 = vsel %vm668, %v670, %v671
        %v674 = vcombine.high %v672, %v672
        %vm676 = vcmask 1043456
        %v677 = vsel %vm676, %v672, 0.0
        %v678 = vrot.slane %v677, 4
        %v679 = vadd.f32 %v677, %v678
        %v680 = vrot.slane %v679, 2
        %v681 = vadd.f32 %v679, %v680
        %v682 = vrot.slane %v681, 1
        %v683 = vadd.f32 %v681, %v682
        %v684 = vsel %vm676, %v674, 0.0
        %v685 = vrot.slane %v684, 4
        %v686 = vadd.f32 %v684, %v685
        %v687 = vrot.slane %v686, 2
        %v688 = vadd.f32 %v686, %v687
        %v689 = vrot.slane %v688, 1
        %v690 = vadd.f32 %v688, %v689
        %v693 = vcombine.low %v683, %v690
        %v695 = vsel %vm344, %v693, 0.0
        %v697 = vlaneseq
        %v698 = vshrl.u32 %v697, 7
        %v699 = vsub.s32 0, %v698
        %v700 = vrot.slane %v695, %v699
        %v701 = vlaneseq
        %v702 = vshrl.u32 %v701, 7
        %v703 = vsub.s32 4, %v702
        %v704 = vrot.slane %v695, %v703
        %v707 = vsel %vm360, %v700, 0.0
        %v708 = vsel %vm360, %v704, 0.0
        %v709 = vadd.f32 %v707, %v708
        %710 = vadd.xlane.f32.xlu0 %v709
        %v711 = vpop.xlane.xlu0 %710
        %v712 = vrot.slane %v711, 4
        %v713 = vadd.f32 %v711, %v712
        %v714 = vrot.slane %v713, 2
        %v715 = vadd.f32 %v713, %v714
        %v716 = vrot.slane %v715, 1
        %v717 = vadd.f32 %v715, %v716
        %s718 = vtos %v717
        %v719 = vsel %vm344, 1.0, 0.0
        %v721 = vlaneseq
        %v722 = vshrl.u32 %v721, 7
        %v723 = vsub.s32 0, %v722
        %v724 = vrot.slane %v719, %v723
        %v725 = vlaneseq
        %v726 = vshrl.u32 %v725, 7
        %v727 = vsub.s32 4, %v726
        %v728 = vrot.slane %v719, %v727
        %v731 = vsel %vm360, %v724, 0.0
        %v732 = vsel %vm360, %v728, 0.0
        %v733 = vadd.f32 %v731, %v732
        %734 = vadd.xlane.f32.xlu0 %v733
        %v735 = vpop.xlane.xlu0 %734
        %v736 = vrot.slane %v735, 4
        %v737 = vadd.f32 %v735, %v736
        %v738 = vrot.slane %v737, 2
        %v739 = vadd.f32 %v737, %v738
        %v740 = vrot.slane %v739, 1
        %v741 = vadd.f32 %v739, %v740
        %s742 = vtos %v741
        %v743 = vsel %vm597, 1.0, 0.0
        %v745 = vlaneseq
        %v746 = vshrl.u32 %v745, 7
        %v747 = vsub.s32 0, %v746
        %v748 = vrot.slane %v743, %v747
        %v749 = vlaneseq
        %v750 = vshrl.u32 %v749, 7
        %v751 = vsub.s32 4, %v750
        %v752 = vrot.slane %v743, %v751
        %v755 = vsel %vm360, %v748, 0.0
        %v756 = vsel %vm360, %v752, 0.0
        %v757 = vadd.f32 %v755, %v756
        %758 = vadd.xlane.f32.xlu0 %v757
        %v759 = vpop.xlane.xlu0 %758
        %v760 = vrot.slane %v759, 4
        %v761 = vadd.f32 %v759, %v760
        %v762 = vrot.slane %v761, 2
        %v763 = vadd.f32 %v761, %v762
        %v764 = vrot.slane %v763, 1
        %v765 = vadd.f32 %v763, %v764
        %s766 = vtos %v765
        %vm767 = vcmp.eq.s32.totalorder %v297, 0
        %v768 = vstv %s665
        %v769 = vsel %vm767, %v768, 0.0
        %vm770 = vcmp.eq.s32.totalorder %v297, 1
        %v771 = vstv %s718
        %v772 = vsel %vm770, %v771, 0.0
        %v773 = vadd.f32 %v769, %v772
        %vm774 = vcmp.eq.s32.totalorder %v297, 2
        %v775 = vstv %s742
        %v776 = vsel %vm774, %v775, 0.0
        %v777 = vadd.f32 %v773, %v776
        %vm778 = vcmp.eq.s32.totalorder %v297, 3
        %v779 = vstv %s766
        %v780 = vsel %vm778, %v779, 0.0
        %v781 = vadd.f32 %v777, %v780
        %782 = vst [vmem:[%s280] sm:$0x1] %v781
        %s783 = sand.u32 %s136, 1
        %s784 = scalar_lea.sflag [#allocation4], %s783
        %s785 = sand.u32 %s136, 1
        %s786 = scalar_lea.vmem [#allocation7], %s785
        // Predicated region
        $region59: #{tpu_custom_call.1} parent=35 // pred_check
          %p787 = pneg %p146
        $region60: #{tpu_custom_call.1} parent=35 // pred_check_branch
          %789 = sbr.rel (%p787) target = $region62
        $region61: #{tpu_custom_call.1} parent=35 // pred_region
          %s791 = ssub.s32 16, 16
          %792 = vsyncadd %s784, %s791
          %s793 = smul.addr %s24, 16
          %s794 = scalar_lea.hbm %s4, %s793
          %s796 = sshll.u32 %s786, 4
          %s797 = int_to_ptr.vmem [resolvable:$true] %s796
          %799 = dma.vmem_to_hbm [thread:$0]  %s797, 16, %s794, %s784
        $region62: #{tpu_custom_call.1} parent=35 // pred_fallthru
          _
      $region36: #{tpu_custom_call.1} parent=5 // pred_fallthru
        _
      %p800 = scmp.le.s32.totalorder 2, %s19
      // Predicated region
      $region63: #{tpu_custom_call.1} parent=5 // pred_check
        %p801 = pneg %p800
      $region64: #{tpu_custom_call.1} parent=5 // pred_check_branch
        %803 = sbr.rel (%p801) target = $region66
      $region65: #{tpu_custom_call.1} parent=5 // pred_region
        %s804 = ssub.s32 %s19, 2
        // Predicated region
        $region67: #{tpu_custom_call.1} parent=65 // pred_check
          %p805 = pneg %p152
        $region68: #{tpu_custom_call.1} parent=65 // pred_check_branch
          %807 = sbr.rel (%p805) target = $region70
        $region69: #{tpu_custom_call.1} parent=65 // pred_region
          %s808 = sand.u32 %s137, 1
          %s809 = scalar_lea.sflag [#allocation4], %s808
          %s810 = sand.u32 %s137, 1
          %s811 = scalar_lea.vmem [#allocation7], %s810
          %812 = dma.done %s809, 16
        $region70: #{tpu_custom_call.1} parent=65 // pred_fallthru
          _
      $region66: #{tpu_custom_call.1} parent=5 // pred_fallthru
        _
    $region6: #{tpu_custom_call.1} parent=1 // loop_footer
      %s23 = sadd.s32 1, %s19
    $region7: #{tpu_custom_call.1} parent=1 // loop_footer_branch
      %18 = sbr.rel target = $region3
    $region8: #{tpu_custom_call.1} parent=1 // loop_exit
      _
    %813 = vsyncpa [#allocation3], 1
    %s814 = scalar_lea.sflag [#allocation3], 1
    %815 = vsyncpa %s814, 1
    %816 = vsyncpa [#allocation6], 1
    %s817 = scalar_lea.sflag [#allocation6], 1
    %818 = vsyncpa %s817, 1
    %819 = vsyncpa [#allocation4], 1
    %s820 = scalar_lea.sflag [#allocation4], 1
    %821 = vsyncpa %s820, 1

</llo_original>
